<compile_context>
chip_gen: v5e
topology: v5e:2x2
jax: 0.10.0
libtpu: 0.0.40
codegen_flags: <defaults>
</compile_context>

<pallas_src>
import functools

import jax
import jax.numpy as jnp
from jax import lax
from jax.experimental import pallas as pl
from jax.experimental.pallas import tpu as pltpu


def _round_up(n, m):
    return (n + m - 1) // m * m


def lstm_recurrence_kernel(gi_ref, whh_ref, hid_ref, h_scr, c_scr, *,
                           tb, hidden_dim):
    """One grid step == `tb` LSTM timesteps.

    gi_ref : (Tb, Bp, 4H)  precomputed x @ W_ih^T + (b_ih + b_hh), time-major
    whh_ref: (H, 4H)       fused hidden->gates weight (pre-transposed)
    hid_ref: (Tb, Bp, H)   hidden state output slab (time-major)
    h_scr, c_scr: (Bp, H)  recurrent state, persists across grid steps
    """
    H = hidden_dim

    @pl.when(pl.program_id(0) == 0)
    def _():
        # PyTorch: hx = None -> (h0, c0) = zeros
        h_scr[...] = jnp.zeros_like(h_scr)
        c_scr[...] = jnp.zeros_like(c_scr)

    # Hoisted out of the time loop: fused hidden weight loaded once.
    whh = whh_ref[...]

    def step(ti, carry):
        h, c = carry
        # Single fused MXU matmul per timestep (all 4 gates, 4H lanes).
        gates = gi_ref[ti] + jnp.dot(h, whh, preferred_element_type=jnp.float32)
        i = jax.nn.sigmoid(gates[:, 0 * H:1 * H])
        f = jax.nn.sigmoid(gates[:, 1 * H:2 * H])
        g = jnp.tanh(gates[:, 2 * H:3 * H])
        o = jax.nn.sigmoid(gates[:, 3 * H:4 * H])
        c_new = f * c + i * g
        h_new = o * jnp.tanh(c_new)
        hid_ref[ti] = h_new.astype(hid_ref.dtype)
        return h_new, c_new

    h_fin, c_fin = lax.fori_loop(0, tb, step, (h_scr[...], c_scr[...]),
                                 unroll=True)
    h_scr[...] = h_fin
    c_scr[...] = c_fin


@functools.partial(jax.jit, static_argnames=("tb",))
def lstm_cls_reg_forward(x, params, tb=8):
    """x: (B, T, input_size) float32.

    Returns (class_out (B, T, n_class), pose_out (B, T, n_pose)),
    matching LSTMclsReg.forward.
    """
    B, T, _ = x.shape
    H = params["w_hh_t"].shape[0]

    # ---- parallel pre-pass (no recurrent dependence): input-side gate matmul.
    # Layout folded into the contraction so the result is already time-major.
    gi = jnp.einsum("btd,dg->tbg", x, params["w_ih_t"]) + params["b_gates"]

    # ---- pad batch to a sublane multiple and time to the block size.
    Bp = _round_up(B, 8)
    Tb = tb
    Tp = _round_up(T, Tb)
    gi_p = jnp.pad(gi, ((0, Tp - T), (0, Bp - B), (0, 0)))

    grid_spec = pltpu.PrefetchScalarGridSpec(
        num_scalar_prefetch=0,
        grid=(Tp // Tb,),
        in_specs=[
            pl.BlockSpec((Tb, Bp, 4 * H), lambda t: (t, 0, 0)),   # gi block
            pl.BlockSpec((H, 4 * H), lambda t: (0, 0)),           # fused W_hh
        ],
        out_specs=pl.BlockSpec((Tb, Bp, H), lambda t: (t, 0, 0)),
        scratch_shapes=[pltpu.VMEM((Bp, H), jnp.float32),          # h
                        pltpu.VMEM((Bp, H), jnp.float32)],         # c
    )

    hidden_tm = pl.pallas_call(
        functools.partial(lstm_recurrence_kernel, tb=Tb, hidden_dim=H),
        out_shape=jax.ShapeDtypeStruct((Tp, Bp, H), jnp.float32),
        grid_spec=grid_spec,
        compiler_params=pltpu.CompilerParams(
            dimension_semantics=("arbitrary",)),   # serial recurrence over time
    )(gi_p, params["w_hh_t"])

    hidden_tm = hidden_tm[:T, :B]                  # (T, B, H), drop padding

    # ---- heads (no recurrence): one fused (T*B, H) @ (H, C+P) matmul;
    #      the time-major -> batch-first transpose is folded into the einsum.
    w_heads = jnp.concatenate([params["w_class_t"], params["w_pose_t"]], axis=1)
    b_heads = jnp.concatenate([params["b_class"], params["b_pose"]], axis=-1)
    heads = jnp.einsum("tbh,hk->btk", hidden_tm, w_heads) + b_heads
    n_class = params["w_class_t"].shape[1]
    class_out = heads[..., :n_class]
    pose_out = heads[..., n_class:]
    return class_out, pose_out


def init_params(key, input_size, hidden_dim, n_class, n_pose=16):
    """Deterministic init mirroring PyTorch defaults (U(-1/sqrt(H), 1/sqrt(H)))."""
    H = hidden_dim
    k = 1.0 / jnp.sqrt(jnp.float32(H))
    keys = jax.random.split(key, 8)
    u = lambda kk, shape: jax.random.uniform(kk, shape, jnp.float32, -k, k)

    # nn.LSTM parameters, gate order (i, f, g, o)
    w_ih = u(keys[0], (4 * H, input_size))
    w_hh = u(keys[1], (4 * H, H))
    b_ih = u(keys[2], (4 * H,))
    b_hh = u(keys[3], (4 * H,))

    # nn.Linear heads (fan_in = H)
    w_class = u(keys[4], (n_class, H))
    b_class = u(keys[5], (n_class,))
    w_pose = u(keys[6], (n_pose, H))
    b_pose = u(keys[7], (n_pose,))

    params = {
        # pre-transposed so matmuls are x @ W / h @ W; LSTM biases fused.
        "w_ih_t": w_ih.T,                 # (D, 4H)
        "w_hh_t": w_hh.T,                 # (H, 4H)
        "b_gates": (b_ih + b_hh),         # (4H,)
        "w_class_t": w_class.T,           # (H, C)
        "b_class": b_class,
        "w_pose_t": w_pose.T,             # (H, P)
        "b_pose": b_pose,
    }
    raw = {"w_ih": w_ih, "w_hh": w_hh, "b_ih": b_ih, "b_hh": b_hh,
           "w_class": w_class, "b_class": b_class,
           "w_pose": w_pose, "b_pose": b_pose}
    return params, raw


def lstm_reference(x, raw):
    """Pure-JAX reference matching torch.nn.LSTM + two Linear heads."""
    B, T, _ = x.shape
    H = raw["w_hh"].shape[1]
    w_ih, w_hh, b_ih, b_hh = raw["w_ih"], raw["w_hh"], raw["b_ih"], raw["b_hh"]

    def step(carry, x_t):
        h, c = carry
        gates = x_t @ w_ih.T + b_ih + h @ w_hh.T + b_hh
        i = jax.nn.sigmoid(gates[:, 0 * H:1 * H])
        f = jax.nn.sigmoid(gates[:, 1 * H:2 * H])
        g = jnp.tanh(gates[:, 2 * H:3 * H])
        o = jax.nn.sigmoid(gates[:, 3 * H:4 * H])
        c_new = f * c + i * g
        h_new = o * jnp.tanh(c_new)
        return (h_new, c_new), h_new

    h0 = jnp.zeros((B, H), jnp.float32)
    c0 = jnp.zeros((B, H), jnp.float32)
    _, hid_tm = lax.scan(step, (h0, c0), jnp.transpose(x, (1, 0, 2)))
    hidden = jnp.transpose(hid_tm, (1, 0, 2))
    class_out = hidden @ raw["w_class"].T + raw["b_class"]
    pose_out = hidden @ raw["w_pose"].T + raw["b_pose"]
    return class_out, pose_out


if __name__ == "__main__":
    B, T, D_IN, HID, N_CLASS, N_POSE = 2, 8, 16, 32, 8, 16

    key = jax.random.PRNGKey(0)
    k_x, k_p = jax.random.split(key)
    x = jax.random.normal(k_x, (B, T, D_IN), dtype=jnp.float32)
    params, raw = init_params(k_p, D_IN, HID, N_CLASS, N_POSE)

    class_out, pose_out = lstm_cls_reg_forward(x, params, tb=8)
    jax.block_until_ready((class_out, pose_out))

    ref_cls, ref_pose = lstm_reference(x, raw)
    assert class_out.shape == (B, T, N_CLASS)
    assert pose_out.shape == (B, T, N_POSE)
    assert jnp.allclose(class_out, ref_cls, atol=1e-5, rtol=1e-5)
    assert jnp.allclose(pose_out, ref_pose, atol=1e-5, rtol=1e-5)

    print("KERNEL_OK")
</pallas_src>

<mosaic_0001>
module attributes {stable_mosaic.version = 11 : i64} {
  func.func @lstm_recurrence_kernel(%arg0: i32, %arg1: memref<8x8x128xf32, #tpu.memory_space<vmem>>, %arg2: memref<32x128xf32, #tpu.memory_space<vmem>>, %arg3: memref<8x8x32xf32, #tpu.memory_space<vmem>>, %arg4: memref<8x32xf32, #tpu.memory_space<vmem>>, %arg5: memref<8x32xf32, #tpu.memory_space<vmem>>) attributes {dimension_semantics = [#tpu.dimension_semantics<arbitrary>], iteration_bounds = array<i64: 1>, scalar_prefetch = 0 : i64, scratch_operands = 2 : i64, tpu.core_type = #tpu.core_type<tc>, window_params = [{transform_indices = @transform_0, window_bounds = array<i64: 8, 8, 128>}, {pipeline_mode = #tpu.pipeline_mode<synchronous>, transform_indices = @transform_1, window_bounds = array<i64: 32, 128>}, {transform_indices = @transform_2, window_bounds = array<i64: 8, 8, 32>}]} {
    %c0_i32 = arith.constant 0 : i32
    %0 = arith.cmpi eq, %arg0, %c0_i32 : i32
    %1 = arith.extui %0 : i1 to i32
    %c0_i32_0 = arith.constant 0 : i32
    %2 = arith.cmpi ne, %1, %c0_i32_0 : i32
    scf.if %2 {
      %cst_74 = arith.constant 0.000000e+00 : f32
      %280 = vector.broadcast %cst_74 : f32 to vector<8x32xf32>
      %c0_75 = arith.constant 0 : index
      %c0_76 = arith.constant 0 : index
      %281 = vector.load %arg4[%c0_75, %c0_76] : memref<8x32xf32, #tpu.memory_space<vmem>>, vector<8x32xf32>
      tpu.vector_store %arg4[%c0_75, %c0_76], %280 {strides = array<i32>} : memref<8x32xf32, #tpu.memory_space<vmem>>, vector<8x32xf32>,
      %cst_77 = arith.constant 0.000000e+00 : f32
      %282 = vector.broadcast %cst_77 : f32 to vector<8x32xf32>
      %c0_78 = arith.constant 0 : index
      %c0_79 = arith.constant 0 : index
      %283 = vector.load %arg5[%c0_78, %c0_79] : memref<8x32xf32, #tpu.memory_space<vmem>>, vector<8x32xf32>
      tpu.vector_store %arg5[%c0_78, %c0_79], %282 {strides = array<i32>} : memref<8x32xf32, #tpu.memory_space<vmem>>, vector<8x32xf32>,
    } else {
    }
    %c0 = arith.constant 0 : index
    %c0_1 = arith.constant 0 : index
    %3 = vector.load %arg2[%c0, %c0_1] : memref<32x128xf32, #tpu.memory_space<vmem>>, vector<32x128xf32>
    %c0_2 = arith.constant 0 : index
    %c0_3 = arith.constant 0 : index
    %4 = vector.load %arg4[%c0_2, %c0_3] : memref<8x32xf32, #tpu.memory_space<vmem>>, vector<8x32xf32>
    %c0_4 = arith.constant 0 : index
    %c0_5 = arith.constant 0 : index
    %5 = vector.load %arg5[%c0_4, %c0_5] : memref<8x32xf32, #tpu.memory_space<vmem>>, vector<8x32xf32>
    %c0_i32_6 = arith.constant 0 : i32
    %6 = arith.index_cast %c0_i32_6 : i32 to index
    %c0_7 = arith.constant 0 : index
    %c0_8 = arith.constant 0 : index
    %7 = vector.load %arg1[%6, %c0_7, %c0_8] : memref<8x8x128xf32, #tpu.memory_space<vmem>>, vector<1x8x128xf32>
    %8 = vector.shape_cast %7 : vector<1x8x128xf32> to vector<8x128xf32>
    %cst = arith.constant dense<0.000000e+00> : vector<8x128xf32>
    %9 = tpu.matmul %4, %3, %cst {dimension_numbers = #tpu.dot_dimension_numbers<[1], [0], [0], [1], [0, 0, 1, 1], [], []>} : vector<8x32xf32>, vector<32x128xf32>, vector<8x128xf32> -> vector<8x128xf32>
    %10 = arith.addf %8, %9 : vector<8x128xf32>
    %11 = vector.extract_strided_slice %10 {offsets = [0, 0], sizes = [8, 32], strides = [1, 1]} : vector<8x128xf32> to vector<8x32xf32>
    %12 = arith.negf %11 : vector<8x32xf32>
    %13 = math.exp %12 : vector<8x32xf32>
    %cst_9 = arith.constant 1.000000e+00 : f32
    %14 = vector.broadcast %cst_9 : f32 to vector<8x32xf32>
    %15 = arith.addf %14, %13 : vector<8x32xf32>
    %16 = arith.divf %14, %15 : vector<8x32xf32>
    %17 = vector.extract_strided_slice %10 {offsets = [0, 32], sizes = [8, 32], strides = [1, 1]} : vector<8x128xf32> to vector<8x32xf32>
    %18 = arith.negf %17 : vector<8x32xf32>
    %19 = math.exp %18 : vector<8x32xf32>
    %cst_10 = arith.constant 1.000000e+00 : f32
    %20 = vector.broadcast %cst_10 : f32 to vector<8x32xf32>
    %21 = arith.addf %20, %19 : vector<8x32xf32>
    %22 = arith.divf %20, %21 : vector<8x32xf32>
    %23 = vector.extract_strided_slice %10 {offsets = [0, 64], sizes = [8, 32], strides = [1, 1]} : vector<8x128xf32> to vector<8x32xf32>
    %24 = math.tanh %23 : vector<8x32xf32>
    %25 = vector.extract_strided_slice %10 {offsets = [0, 96], sizes = [8, 32], strides = [1, 1]} : vector<8x128xf32> to vector<8x32xf32>
    %26 = arith.negf %25 : vector<8x32xf32>
    %27 = math.exp %26 : vector<8x32xf32>
    %cst_11 = arith.constant 1.000000e+00 : f32
    %28 = vector.broadcast %cst_11 : f32 to vector<8x32xf32>
    %29 = arith.addf %28, %27 : vector<8x32xf32>
    %30 = arith.divf %28, %29 : vector<8x32xf32>
    %31 = arith.mulf %22, %5 : vector<8x32xf32>
    %32 = arith.mulf %16, %24 : vector<8x32xf32>
    %33 = arith.addf %31, %32 : vector<8x32xf32>
    %34 = math.tanh %33 : vector<8x32xf32>
    %35 = arith.mulf %30, %34 : vector<8x32xf32>
    %36 = arith.index_cast %c0_i32_6 : i32 to index
    %c0_12 = arith.constant 0 : index
    %c0_13 = arith.constant 0 : index
    %37 = vector.load %arg3[%36, %c0_12, %c0_13] : memref<8x8x32xf32, #tpu.memory_space<vmem>>, vector<1x8x32xf32>
    %38 = vector.shape_cast %37 : vector<1x8x32xf32> to vector<8x32xf32>
    %39 = vector.shape_cast %35 : vector<8x32xf32> to vector<1x8x32xf32>
    tpu.vector_store %arg3[%36, %c0_12, %c0_13], %39 {strides = array<i32>} : memref<8x8x32xf32, #tpu.memory_space<vmem>>, vector<1x8x32xf32>,
    %c1_i32 = arith.constant 1 : i32
    %40 = arith.index_cast %c1_i32 : i32 to index
    %c0_14 = arith.constant 0 : index
    %c0_15 = arith.constant 0 : index
    %41 = vector.load %arg1[%40, %c0_14, %c0_15] : memref<8x8x128xf32, #tpu.memory_space<vmem>>, vector<1x8x128xf32>
    %42 = vector.shape_cast %41 : vector<1x8x128xf32> to vector<8x128xf32>
    %cst_16 = arith.constant dense<0.000000e+00> : vector<8x128xf32>
    %43 = tpu.matmul %35, %3, %cst_16 {dimension_numbers = #tpu.dot_dimension_numbers<[1], [0], [0], [1], [0, 0, 1, 1], [], []>} : vector<8x32xf32>, vector<32x128xf32>, vector<8x128xf32> -> vector<8x128xf32>
    %44 = arith.addf %42, %43 : vector<8x128xf32>
    %45 = vector.extract_strided_slice %44 {offsets = [0, 0], sizes = [8, 32], strides = [1, 1]} : vector<8x128xf32> to vector<8x32xf32>
    %46 = arith.negf %45 : vector<8x32xf32>
    %47 = math.exp %46 : vector<8x32xf32>
    %cst_17 = arith.constant 1.000000e+00 : f32
    %48 = vector.broadcast %cst_17 : f32 to vector<8x32xf32>
    %49 = arith.addf %48, %47 : vector<8x32xf32>
    %50 = arith.divf %48, %49 : vector<8x32xf32>
    %51 = vector.extract_strided_slice %44 {offsets = [0, 32], sizes = [8, 32], strides = [1, 1]} : vector<8x128xf32> to vector<8x32xf32>
    %52 = arith.negf %51 : vector<8x32xf32>
    %53 = math.exp %52 : vector<8x32xf32>
    %cst_18 = arith.constant 1.000000e+00 : f32
    %54 = vector.broadcast %cst_18 : f32 to vector<8x32xf32>
    %55 = arith.addf %54, %53 : vector<8x32xf32>
    %56 = arith.divf %54, %55 : vector<8x32xf32>
    %57 = vector.extract_strided_slice %44 {offsets = [0, 64], sizes = [8, 32], strides = [1, 1]} : vector<8x128xf32> to vector<8x32xf32>
    %58 = math.tanh %57 : vector<8x32xf32>
    %59 = vector.extract_strided_slice %44 {offsets = [0, 96], sizes = [8, 32], strides = [1, 1]} : vector<8x128xf32> to vector<8x32xf32>
    %60 = arith.negf %59 : vector<8x32xf32>
    %61 = math.exp %60 : vector<8x32xf32>
    %cst_19 = arith.constant 1.000000e+00 : f32
    %62 = vector.broadcast %cst_19 : f32 to vector<8x32xf32>
    %63 = arith.addf %62, %61 : vector<8x32xf32>
    %64 = arith.divf %62, %63 : vector<8x32xf32>
    %65 = arith.mulf %56, %33 : vector<8x32xf32>
    %66 = arith.mulf %50, %58 : vector<8x32xf32>
    %67 = arith.addf %65, %66 : vector<8x32xf32>
    %68 = math.tanh %67 : vector<8x32xf32>
    %69 = arith.mulf %64, %68 : vector<8x32xf32>
    %70 = arith.index_cast %c1_i32 : i32 to index
    %c0_20 = arith.constant 0 : index
    %c0_21 = arith.constant 0 : index
    %71 = vector.load %arg3[%70, %c0_20, %c0_21] : memref<8x8x32xf32, #tpu.memory_space<vmem>>, vector<1x8x32xf32>
    %72 = vector.shape_cast %71 : vector<1x8x32xf32> to vector<8x32xf32>
    %73 = vector.shape_cast %69 : vector<8x32xf32> to vector<1x8x32xf32>
    tpu.vector_store %arg3[%70, %c0_20, %c0_21], %73 {strides = array<i32>} : memref<8x8x32xf32, #tpu.memory_space<vmem>>, vector<1x8x32xf32>,
    %c2_i32 = arith.constant 2 : i32
    %74 = arith.index_cast %c2_i32 : i32 to index
    %c0_22 = arith.constant 0 : index
    %c0_23 = arith.constant 0 : index
    %75 = vector.load %arg1[%74, %c0_22, %c0_23] : memref<8x8x128xf32, #tpu.memory_space<vmem>>, vector<1x8x128xf32>
    %76 = vector.shape_cast %75 : vector<1x8x128xf32> to vector<8x128xf32>
    %cst_24 = arith.constant dense<0.000000e+00> : vector<8x128xf32>
    %77 = tpu.matmul %69, %3, %cst_24 {dimension_numbers = #tpu.dot_dimension_numbers<[1], [0], [0], [1], [0, 0, 1, 1], [], []>} : vector<8x32xf32>, vector<32x128xf32>, vector<8x128xf32> -> vector<8x128xf32>
    %78 = arith.addf %76, %77 : vector<8x128xf32>
    %79 = vector.extract_strided_slice %78 {offsets = [0, 0], sizes = [8, 32], strides = [1, 1]} : vector<8x128xf32> to vector<8x32xf32>
    %80 = arith.negf %79 : vector<8x32xf32>
    %81 = math.exp %80 : vector<8x32xf32>
    %cst_25 = arith.constant 1.000000e+00 : f32
    %82 = vector.broadcast %cst_25 : f32 to vector<8x32xf32>
    %83 = arith.addf %82, %81 : vector<8x32xf32>
    %84 = arith.divf %82, %83 : vector<8x32xf32>
    %85 = vector.extract_strided_slice %78 {offsets = [0, 32], sizes = [8, 32], strides = [1, 1]} : vector<8x128xf32> to vector<8x32xf32>
    %86 = arith.negf %85 : vector<8x32xf32>
    %87 = math.exp %86 : vector<8x32xf32>
    %cst_26 = arith.constant 1.000000e+00 : f32
    %88 = vector.broadcast %cst_26 : f32 to vector<8x32xf32>
    %89 = arith.addf %88, %87 : vector<8x32xf32>
    %90 = arith.divf %88, %89 : vector<8x32xf32>
    %91 = vector.extract_strided_slice %78 {offsets = [0, 64], sizes = [8, 32], strides = [1, 1]} : vector<8x128xf32> to vector<8x32xf32>
    %92 = math.tanh %91 : vector<8x32xf32>
    %93 = vector.extract_strided_slice %78 {offsets = [0, 96], sizes = [8, 32], strides = [1, 1]} : vector<8x128xf32> to vector<8x32xf32>
    %94 = arith.negf %93 : vector<8x32xf32>
    %95 = math.exp %94 : vector<8x32xf32>
    %cst_27 = arith.constant 1.000000e+00 : f32
    %96 = vector.broadcast %cst_27 : f32 to vector<8x32xf32>
    %97 = arith.addf %96, %95 : vector<8x32xf32>
    %98 = arith.divf %96, %97 : vector<8x32xf32>
    %99 = arith.mulf %90, %67 : vector<8x32xf32>
    %100 = arith.mulf %84, %92 : vector<8x32xf32>
    %101 = arith.addf %99, %100 : vector<8x32xf32>
    %102 = math.tanh %101 : vector<8x32xf32>
    %103 = arith.mulf %98, %102 : vector<8x32xf32>
    %104 = arith.index_cast %c2_i32 : i32 to index
    %c0_28 = arith.constant 0 : index
    %c0_29 = arith.constant 0 : index
    %105 = vector.load %arg3[%104, %c0_28, %c0_29] : memref<8x8x32xf32, #tpu.memory_space<vmem>>, vector<1x8x32xf32>
    %106 = vector.shape_cast %105 : vector<1x8x32xf32> to vector<8x32xf32>
    %107 = vector.shape_cast %103 : vector<8x32xf32> to vector<1x8x32xf32>
    tpu.vector_store %arg3[%104, %c0_28, %c0_29], %107 {strides = array<i32>} : memref<8x8x32xf32, #tpu.memory_space<vmem>>, vector<1x8x32xf32>,
    %c3_i32 = arith.constant 3 : i32
    %108 = arith.index_cast %c3_i32 : i32 to index
    %c0_30 = arith.constant 0 : index
    %c0_31 = arith.constant 0 : index
    %109 = vector.load %arg1[%108, %c0_30, %c0_31] : memref<8x8x128xf32, #tpu.memory_space<vmem>>, vector<1x8x128xf32>
    %110 = vector.shape_cast %109 : vector<1x8x128xf32> to vector<8x128xf32>
    %cst_32 = arith.constant dense<0.000000e+00> : vector<8x128xf32>
    %111 = tpu.matmul %103, %3, %cst_32 {dimension_numbers = #tpu.dot_dimension_numbers<[1], [0], [0], [1], [0, 0, 1, 1], [], []>} : vector<8x32xf32>, vector<32x128xf32>, vector<8x128xf32> -> vector<8x128xf32>
    %112 = arith.addf %110, %111 : vector<8x128xf32>
    %113 = vector.extract_strided_slice %112 {offsets = [0, 0], sizes = [8, 32], strides = [1, 1]} : vector<8x128xf32> to vector<8x32xf32>
    %114 = arith.negf %113 : vector<8x32xf32>
    %115 = math.exp %114 : vector<8x32xf32>
    %cst_33 = arith.constant 1.000000e+00 : f32
    %116 = vector.broadcast %cst_33 : f32 to vector<8x32xf32>
    %117 = arith.addf %116, %115 : vector<8x32xf32>
    %118 = arith.divf %116, %117 : vector<8x32xf32>
    %119 = vector.extract_strided_slice %112 {offsets = [0, 32], sizes = [8, 32], strides = [1, 1]} : vector<8x128xf32> to vector<8x32xf32>
    %120 = arith.negf %119 : vector<8x32xf32>
    %121 = math.exp %120 : vector<8x32xf32>
    %cst_34 = arith.constant 1.000000e+00 : f32
    %122 = vector.broadcast %cst_34 : f32 to vector<8x32xf32>
    %123 = arith.addf %122, %121 : vector<8x32xf32>
    %124 = arith.divf %122, %123 : vector<8x32xf32>
    %125 = vector.extract_strided_slice %112 {offsets = [0, 64], sizes = [8, 32], strides = [1, 1]} : vector<8x128xf32> to vector<8x32xf32>
    %126 = math.tanh %125 : vector<8x32xf32>
    %127 = vector.extract_strided_slice %112 {offsets = [0, 96], sizes = [8, 32], strides = [1, 1]} : vector<8x128xf32> to vector<8x32xf32>
    %128 = arith.negf %127 : vector<8x32xf32>
    %129 = math.exp %128 : vector<8x32xf32>
    %cst_35 = arith.constant 1.000000e+00 : f32
    %130 = vector.broadcast %cst_35 : f32 to vector<8x32xf32>
    %131 = arith.addf %130, %129 : vector<8x32xf32>
    %132 = arith.divf %130, %131 : vector<8x32xf32>
    %133 = arith.mulf %124, %101 : vector<8x32xf32>
    %134 = arith.mulf %118, %126 : vector<8x32xf32>
    %135 = arith.addf %133, %134 : vector<8x32xf32>
    %136 = math.tanh %135 : vector<8x32xf32>
    %137 = arith.mulf %132, %136 : vector<8x32xf32>
    %138 = arith.index_cast %c3_i32 : i32 to index
    %c0_36 = arith.constant 0 : index
    %c0_37 = arith.constant 0 : index
    %139 = vector.load %arg3[%138, %c0_36, %c0_37] : memref<8x8x32xf32, #tpu.memory_space<vmem>>, vector<1x8x32xf32>
    %140 = vector.shape_cast %139 : vector<1x8x32xf32> to vector<8x32xf32>
    %141 = vector.shape_cast %137 : vector<8x32xf32> to vector<1x8x32xf32>
    tpu.vector_store %arg3[%138, %c0_36, %c0_37], %141 {strides = array<i32>} : memref<8x8x32xf32, #tpu.memory_space<vmem>>, vector<1x8x32xf32>,
    %c4_i32 = arith.constant 4 : i32
    %142 = arith.index_cast %c4_i32 : i32 to index
    %c0_38 = arith.constant 0 : index
    %c0_39 = arith.constant 0 : index
    %143 = vector.load %arg1[%142, %c0_38, %c0_39] : memref<8x8x128xf32, #tpu.memory_space<vmem>>, vector<1x8x128xf32>
    %144 = vector.shape_cast %143 : vector<1x8x128xf32> to vector<8x128xf32>
    %cst_40 = arith.constant dense<0.000000e+00> : vector<8x128xf32>
    %145 = tpu.matmul %137, %3, %cst_40 {dimension_numbers = #tpu.dot_dimension_numbers<[1], [0], [0], [1], [0, 0, 1, 1], [], []>} : vector<8x32xf32>, vector<32x128xf32>, vector<8x128xf32> -> vector<8x128xf32>
    %146 = arith.addf %144, %145 : vector<8x128xf32>
    %147 = vector.extract_strided_slice %146 {offsets = [0, 0], sizes = [8, 32], strides = [1, 1]} : vector<8x128xf32> to vector<8x32xf32>
    %148 = arith.negf %147 : vector<8x32xf32>
    %149 = math.exp %148 : vector<8x32xf32>
    %cst_41 = arith.constant 1.000000e+00 : f32
    %150 = vector.broadcast %cst_41 : f32 to vector<8x32xf32>
    %151 = arith.addf %150, %149 : vector<8x32xf32>
    %152 = arith.divf %150, %151 : vector<8x32xf32>
    %153 = vector.extract_strided_slice %146 {offsets = [0, 32], sizes = [8, 32], strides = [1, 1]} : vector<8x128xf32> to vector<8x32xf32>
    %154 = arith.negf %153 : vector<8x32xf32>
    %155 = math.exp %154 : vector<8x32xf32>
    %cst_42 = arith.constant 1.000000e+00 : f32
    %156 = vector.broadcast %cst_42 : f32 to vector<8x32xf32>
    %157 = arith.addf %156, %155 : vector<8x32xf32>
    %158 = arith.divf %156, %157 : vector<8x32xf32>
    %159 = vector.extract_strided_slice %146 {offsets = [0, 64], sizes = [8, 32], strides = [1, 1]} : vector<8x128xf32> to vector<8x32xf32>
    %160 = math.tanh %159 : vector<8x32xf32>
    %161 = vector.extract_strided_slice %146 {offsets = [0, 96], sizes = [8, 32], strides = [1, 1]} : vector<8x128xf32> to vector<8x32xf32>
    %162 = arith.negf %161 : vector<8x32xf32>
    %163 = math.exp %162 : vector<8x32xf32>
    %cst_43 = arith.constant 1.000000e+00 : f32
    %164 = vector.broadcast %cst_43 : f32 to vector<8x32xf32>
    %165 = arith.addf %164, %163 : vector<8x32xf32>
    %166 = arith.divf %164, %165 : vector<8x32xf32>
    %167 = arith.mulf %158, %135 : vector<8x32xf32>
    %168 = arith.mulf %152, %160 : vector<8x32xf32>
    %169 = arith.addf %167, %168 : vector<8x32xf32>
    %170 = math.tanh %169 : vector<8x32xf32>
    %171 = arith.mulf %166, %170 : vector<8x32xf32>
    %172 = arith.index_cast %c4_i32 : i32 to index
    %c0_44 = arith.constant 0 : index
    %c0_45 = arith.constant 0 : index
    %173 = vector.load %arg3[%172, %c0_44, %c0_45] : memref<8x8x32xf32, #tpu.memory_space<vmem>>, vector<1x8x32xf32>
    %174 = vector.shape_cast %173 : vector<1x8x32xf32> to vector<8x32xf32>
    %175 = vector.shape_cast %171 : vector<8x32xf32> to vector<1x8x32xf32>
    tpu.vector_store %arg3[%172, %c0_44, %c0_45], %175 {strides = array<i32>} : memref<8x8x32xf32, #tpu.memory_space<vmem>>, vector<1x8x32xf32>,
    %c5_i32 = arith.constant 5 : i32
    %176 = arith.index_cast %c5_i32 : i32 to index
    %c0_46 = arith.constant 0 : index
    %c0_47 = arith.constant 0 : index
    %177 = vector.load %arg1[%176, %c0_46, %c0_47] : memref<8x8x128xf32, #tpu.memory_space<vmem>>, vector<1x8x128xf32>
    %178 = vector.shape_cast %177 : vector<1x8x128xf32> to vector<8x128xf32>
    %cst_48 = arith.constant dense<0.000000e+00> : vector<8x128xf32>
    %179 = tpu.matmul %171, %3, %cst_48 {dimension_numbers = #tpu.dot_dimension_numbers<[1], [0], [0], [1], [0, 0, 1, 1], [], []>} : vector<8x32xf32>, vector<32x128xf32>, vector<8x128xf32> -> vector<8x128xf32>
    %180 = arith.addf %178, %179 : vector<8x128xf32>
    %181 = vector.extract_strided_slice %180 {offsets = [0, 0], sizes = [8, 32], strides = [1, 1]} : vector<8x128xf32> to vector<8x32xf32>
    %182 = arith.negf %181 : vector<8x32xf32>
    %183 = math.exp %182 : vector<8x32xf32>
    %cst_49 = arith.constant 1.000000e+00 : f32
    %184 = vector.broadcast %cst_49 : f32 to vector<8x32xf32>
    %185 = arith.addf %184, %183 : vector<8x32xf32>
    %186 = arith.divf %184, %185 : vector<8x32xf32>
    %187 = vector.extract_strided_slice %180 {offsets = [0, 32], sizes = [8, 32], strides = [1, 1]} : vector<8x128xf32> to vector<8x32xf32>
    %188 = arith.negf %187 : vector<8x32xf32>
    %189 = math.exp %188 : vector<8x32xf32>
    %cst_50 = arith.constant 1.000000e+00 : f32
    %190 = vector.broadcast %cst_50 : f32 to vector<8x32xf32>
    %191 = arith.addf %190, %189 : vector<8x32xf32>
    %192 = arith.divf %190, %191 : vector<8x32xf32>
    %193 = vector.extract_strided_slice %180 {offsets = [0, 64], sizes = [8, 32], strides = [1, 1]} : vector<8x128xf32> to vector<8x32xf32>
    %194 = math.tanh %193 : vector<8x32xf32>
    %195 = vector.extract_strided_slice %180 {offsets = [0, 96], sizes = [8, 32], strides = [1, 1]} : vector<8x128xf32> to vector<8x32xf32>
    %196 = arith.negf %195 : vector<8x32xf32>
    %197 = math.exp %196 : vector<8x32xf32>
    %cst_51 = arith.constant 1.000000e+00 : f32
    %198 = vector.broadcast %cst_51 : f32 to vector<8x32xf32>
    %199 = arith.addf %198, %197 : vector<8x32xf32>
    %200 = arith.divf %198, %199 : vector<8x32xf32>
    %201 = arith.mulf %192, %169 : vector<8x32xf32>
    %202 = arith.mulf %186, %194 : vector<8x32xf32>
    %203 = arith.addf %201, %202 : vector<8x32xf32>
    %204 = math.tanh %203 : vector<8x32xf32>
    %205 = arith.mulf %200, %204 : vector<8x32xf32>
    %206 = arith.index_cast %c5_i32 : i32 to index
    %c0_52 = arith.constant 0 : index
    %c0_53 = arith.constant 0 : index
    %207 = vector.load %arg3[%206, %c0_52, %c0_53] : memref<8x8x32xf32, #tpu.memory_space<vmem>>, vector<1x8x32xf32>
    %208 = vector.shape_cast %207 : vector<1x8x32xf32> to vector<8x32xf32>
    %209 = vector.shape_cast %205 : vector<8x32xf32> to vector<1x8x32xf32>
    tpu.vector_store %arg3[%206, %c0_52, %c0_53], %209 {strides = array<i32>} : memref<8x8x32xf32, #tpu.memory_space<vmem>>, vector<1x8x32xf32>,
    %c6_i32 = arith.constant 6 : i32
    %210 = arith.index_cast %c6_i32 : i32 to index
    %c0_54 = arith.constant 0 : index
    %c0_55 = arith.constant 0 : index
    %211 = vector.load %arg1[%210, %c0_54, %c0_55] : memref<8x8x128xf32, #tpu.memory_space<vmem>>, vector<1x8x128xf32>
    %212 = vector.shape_cast %211 : vector<1x8x128xf32> to vector<8x128xf32>
    %cst_56 = arith.constant dense<0.000000e+00> : vector<8x128xf32>
    %213 = tpu.matmul %205, %3, %cst_56 {dimension_numbers = #tpu.dot_dimension_numbers<[1], [0], [0], [1], [0, 0, 1, 1], [], []>} : vector<8x32xf32>, vector<32x128xf32>, vector<8x128xf32> -> vector<8x128xf32>
    %214 = arith.addf %212, %213 : vector<8x128xf32>
    %215 = vector.extract_strided_slice %214 {offsets = [0, 0], sizes = [8, 32], strides = [1, 1]} : vector<8x128xf32> to vector<8x32xf32>
    %216 = arith.negf %215 : vector<8x32xf32>
    %217 = math.exp %216 : vector<8x32xf32>
    %cst_57 = arith.constant 1.000000e+00 : f32
    %218 = vector.broadcast %cst_57 : f32 to vector<8x32xf32>
    %219 = arith.addf %218, %217 : vector<8x32xf32>
    %220 = arith.divf %218, %219 : vector<8x32xf32>
    %221 = vector.extract_strided_slice %214 {offsets = [0, 32], sizes = [8, 32], strides = [1, 1]} : vector<8x128xf32> to vector<8x32xf32>
    %222 = arith.negf %221 : vector<8x32xf32>
    %223 = math.exp %222 : vector<8x32xf32>
    %cst_58 = arith.constant 1.000000e+00 : f32
    %224 = vector.broadcast %cst_58 : f32 to vector<8x32xf32>
    %225 = arith.addf %224, %223 : vector<8x32xf32>
    %226 = arith.divf %224, %225 : vector<8x32xf32>
    %227 = vector.extract_strided_slice %214 {offsets = [0, 64], sizes = [8, 32], strides = [1, 1]} : vector<8x128xf32> to vector<8x32xf32>
    %228 = math.tanh %227 : vector<8x32xf32>
    %229 = vector.extract_strided_slice %214 {offsets = [0, 96], sizes = [8, 32], strides = [1, 1]} : vector<8x128xf32> to vector<8x32xf32>
    %230 = arith.negf %229 : vector<8x32xf32>
    %231 = math.exp %230 : vector<8x32xf32>
    %cst_59 = arith.constant 1.000000e+00 : f32
    %232 = vector.broadcast %cst_59 : f32 to vector<8x32xf32>
    %233 = arith.addf %232, %231 : vector<8x32xf32>
    %234 = arith.divf %232, %233 : vector<8x32xf32>
    %235 = arith.mulf %226, %203 : vector<8x32xf32>
    %236 = arith.mulf %220, %228 : vector<8x32xf32>
    %237 = arith.addf %235, %236 : vector<8x32xf32>
    %238 = math.tanh %237 : vector<8x32xf32>
    %239 = arith.mulf %234, %238 : vector<8x32xf32>
    %240 = arith.index_cast %c6_i32 : i32 to index
    %c0_60 = arith.constant 0 : index
    %c0_61 = arith.constant 0 : index
    %241 = vector.load %arg3[%240, %c0_60, %c0_61] : memref<8x8x32xf32, #tpu.memory_space<vmem>>, vector<1x8x32xf32>
    %242 = vector.shape_cast %241 : vector<1x8x32xf32> to vector<8x32xf32>
    %243 = vector.shape_cast %239 : vector<8x32xf32> to vector<1x8x32xf32>
    tpu.vector_store %arg3[%240, %c0_60, %c0_61], %243 {strides = array<i32>} : memref<8x8x32xf32, #tpu.memory_space<vmem>>, vector<1x8x32xf32>,
    %c7_i32 = arith.constant 7 : i32
    %244 = arith.index_cast %c7_i32 : i32 to index
    %c0_62 = arith.constant 0 : index
    %c0_63 = arith.constant 0 : index
    %245 = vector.load %arg1[%244, %c0_62, %c0_63] : memref<8x8x128xf32, #tpu.memory_space<vmem>>, vector<1x8x128xf32>
    %246 = vector.shape_cast %245 : vector<1x8x128xf32> to vector<8x128xf32>
    %cst_64 = arith.constant dense<0.000000e+00> : vector<8x128xf32>
    %247 = tpu.matmul %239, %3, %cst_64 {dimension_numbers = #tpu.dot_dimension_numbers<[1], [0], [0], [1], [0, 0, 1, 1], [], []>} : vector<8x32xf32>, vector<32x128xf32>, vector<8x128xf32> -> vector<8x128xf32>
    %248 = arith.addf %246, %247 : vector<8x128xf32>
    %249 = vector.extract_strided_slice %248 {offsets = [0, 0], sizes = [8, 32], strides = [1, 1]} : vector<8x128xf32> to vector<8x32xf32>
    %250 = arith.negf %249 : vector<8x32xf32>
    %251 = math.exp %250 : vector<8x32xf32>
    %cst_65 = arith.constant 1.000000e+00 : f32
    %252 = vector.broadcast %cst_65 : f32 to vector<8x32xf32>
    %253 = arith.addf %252, %251 : vector<8x32xf32>
    %254 = arith.divf %252, %253 : vector<8x32xf32>
    %255 = vector.extract_strided_slice %248 {offsets = [0, 32], sizes = [8, 32], strides = [1, 1]} : vector<8x128xf32> to vector<8x32xf32>
    %256 = arith.negf %255 : vector<8x32xf32>
    %257 = math.exp %256 : vector<8x32xf32>
    %cst_66 = arith.constant 1.000000e+00 : f32
    %258 = vector.broadcast %cst_66 : f32 to vector<8x32xf32>
    %259 = arith.addf %258, %257 : vector<8x32xf32>
    %260 = arith.divf %258, %259 : vector<8x32xf32>
    %261 = vector.extract_strided_slice %248 {offsets = [0, 64], sizes = [8, 32], strides = [1, 1]} : vector<8x128xf32> to vector<8x32xf32>
    %262 = math.tanh %261 : vector<8x32xf32>
    %263 = vector.extract_strided_slice %248 {offsets = [0, 96], sizes = [8, 32], strides = [1, 1]} : vector<8x128xf32> to vector<8x32xf32>
    %264 = arith.negf %263 : vector<8x32xf32>
    %265 = math.exp %264 : vector<8x32xf32>
    %cst_67 = arith.constant 1.000000e+00 : f32
    %266 = vector.broadcast %cst_67 : f32 to vector<8x32xf32>
    %267 = arith.addf %266, %265 : vector<8x32xf32>
    %268 = arith.divf %266, %267 : vector<8x32xf32>
    %269 = arith.mulf %260, %237 : vector<8x32xf32>
    %270 = arith.mulf %254, %262 : vector<8x32xf32>
    %271 = arith.addf %269, %270 : vector<8x32xf32>
    %272 = math.tanh %271 : vector<8x32xf32>
    %273 = arith.mulf %268, %272 : vector<8x32xf32>
    %274 = arith.index_cast %c7_i32 : i32 to index
    %c0_68 = arith.constant 0 : index
    %c0_69 = arith.constant 0 : index
    %275 = vector.load %arg3[%274, %c0_68, %c0_69] : memref<8x8x32xf32, #tpu.memory_space<vmem>>, vector<1x8x32xf32>
    %276 = vector.shape_cast %275 : vector<1x8x32xf32> to vector<8x32xf32>
    %277 = vector.shape_cast %273 : vector<8x32xf32> to vector<1x8x32xf32>
    tpu.vector_store %arg3[%274, %c0_68, %c0_69], %277 {strides = array<i32>} : memref<8x8x32xf32, #tpu.memory_space<vmem>>, vector<1x8x32xf32>,
    %c8_i32 = arith.constant 8 : i32
    %c0_70 = arith.constant 0 : index
    %c0_71 = arith.constant 0 : index
    %278 = vector.load %arg4[%c0_70, %c0_71] : memref<8x32xf32, #tpu.memory_space<vmem>>, vector<8x32xf32>
    tpu.vector_store %arg4[%c0_70, %c0_71], %273 {strides = array<i32>} : memref<8x32xf32, #tpu.memory_space<vmem>>, vector<8x32xf32>,
    %c0_72 = arith.constant 0 : index
    %c0_73 = arith.constant 0 : index
    %279 = vector.load %arg5[%c0_72, %c0_73] : memref<8x32xf32, #tpu.memory_space<vmem>>, vector<8x32xf32>
    tpu.vector_store %arg5[%c0_72, %c0_73], %271 {strides = array<i32>} : memref<8x32xf32, #tpu.memory_space<vmem>>, vector<8x32xf32>,
    return
  }
  func.func @transform_0(%arg0: i32) -> (i32, i32, i32) {
    %c0_i32 = arith.constant 0 : i32
    %c0_i32_0 = arith.constant 0 : i32
    %c0_i32_1 = arith.constant 0 : i32
    return %arg0, %c0_i32, %c0_i32_0 : i32, i32, i32
  }
  func.func @transform_1(%arg0: i32) -> (i32, i32) {
    %c0_i32 = arith.constant 0 : i32
    %c0_i32_0 = arith.constant 0 : i32
    %c0_i32_1 = arith.constant 0 : i32
    return %c0_i32, %c0_i32_0 : i32, i32
  }
  func.func @transform_2(%arg0: i32) -> (i32, i32, i32) {
    %c0_i32 = arith.constant 0 : i32
    %c0_i32_0 = arith.constant 0 : i32
    %c0_i32_1 = arith.constant 0 : i32
    return %arg0, %c0_i32, %c0_i32_0 : i32, i32, i32
  }
}

</mosaic_0001>

<llo_original>
// kernel: lstm_cls_reg_forward.1
$region0: #{lstm_cls_reg_forward.1}
  #allocation0 [shape = 'u32[]', space=smem, size = 0x4, offset = 0x4, fixed_abs, tag = 'smem constant byte address 0x4 - core index']
  #allocation1 [shape = 'u32[72,128]{1,0:T(1,128)}', space=vmem, size = 0x9000, scoped, tag = 'internal scratch']
  #allocation2 [shape = 'f32[8,32]{1,0:T(8,128)}', space=vmem, size = 0x1000, scoped, tag = 'scratch operand']
  #allocation3 [shape = 'f32[8,32]{1,0:T(8,128)}', space=vmem, size = 0x1000, scoped, tag = 'scratch operand']
  %s0 = inlined_call_operand.vmem [shape: f32[8,8,128], index: 0, kind: input, shape index: {}]
  %s1 = inlined_call_operand.vmem [shape: f32[32,128], index: 1, kind: input, shape index: {}]
  %s2 = inlined_call_operand.vmem [shape: f32[8,8,32], index: 2, kind: output, shape index: {}]
  %s3 = sld [smem:[#allocation0]]
  $region22: #{lstm_cls_reg_forward.1} parent=0
    _
  %s5 = ssub.s32 1, %s3
  %s6 = scalar_select 0, %s5, %s3
  // Predicated region
  $region2: #{lstm_cls_reg_forward.1} parent=0 // pred_check
    _
  $region3: #{lstm_cls_reg_forward.1} parent=0 // pred_check_branch
    %8 = sbr.rel (0) target = $region5
  $region4: #{lstm_cls_reg_forward.1} parent=0 // pred_region
    _
  $region5: #{lstm_cls_reg_forward.1} parent=0 // pred_fallthru
    _
  // Predicated region
  $region6: #{lstm_cls_reg_forward.1} parent=0 // pred_check
    _
  $region7: #{lstm_cls_reg_forward.1} parent=0 // pred_check_branch
    %10 = sbr.rel (0) target = $region9
  $region8: #{lstm_cls_reg_forward.1} parent=0 // pred_region
    _
  $region9: #{lstm_cls_reg_forward.1} parent=0 // pred_fallthru
    _
  %p11 = scmp.eq.s32.totalorder 0, 0
  // Predicated region
  $region10: #{lstm_cls_reg_forward.1} parent=0 // pred_check
    %p12 = pneg %p11
  $region11: #{lstm_cls_reg_forward.1} parent=0 // pred_check_branch
    %14 = sbr.rel (%p12) target = $region13
  $region12: #{lstm_cls_reg_forward.1} parent=0 // pred_region
    %vm15 = vcmask 261120
    %16 = vst.msk [vmem:[#allocation2] sm:$0xff] %vm15, 0.0
    %17 = vst.msk [vmem:[#allocation3] sm:$0xff] %vm15, 0.0
  $region13: #{lstm_cls_reg_forward.1} parent=0 // pred_fallthru
    _
  %v18 = vld [vmem:[%s1] sm:$0xff]
  %v19 = vld [vmem:[%s1 + $0x8] sm:$0xff]
  %v20 = vld [vmem:[%s1 + $0x10] sm:$0xff]
  %v21 = vld [vmem:[%s1 + $0x18] sm:$0xff]
  %v22 = vld [vmem:[#allocation2] sm:$0xff]
  %v23 = vld [vmem:[#allocation3] sm:$0xff]
  %v24 = vld [vmem:[%s0] sm:$0xff]
  %vm25 = vcmask 261120
  %v27 = vsel %vm25, %v22, 0
  %29 = vmatpush.msra.mxu0 0.0
  %30 = vmatpush.msra.mxu0 0.0
  %31 = vmatpush.msra.mxu0 0.0
  %32 = vmatpush.msra.mxu0 0.0
  %33 = vmatpush.msra.mxu0 0.0
  %34 = vmatpush.msra.mxu0 0.0
  %35 = vmatpush.msra.mxu0 0.0
  %36 = vmatpush.msra.mxu0 0.0
  %37 = vmatpush.msra.mxu0 0.0
  %38 = vmatpush.msra.mxu0 0.0
  %39 = vmatpush.msra.mxu0 0.0
  %40 = vmatpush.msra.mxu0 0.0
  %41 = vmatpush.msra.mxu0 %v21
  %42 = vmatpush.msra.mxu0 %v20
  %43 = vmatpush.msra.mxu0 %v19
  %44 = vmatpush.msra.mxu0 %v18
  %45 = vmatmul.f32.gmra.mxu0 %v27
  %v46 = vpop.f32.mrf.mxu0
  %v47 = vadd.f32 0.0, %v46
  %48 = vdwg.mxu0
  %v49 = vadd.f32 %v24, %v47
  %v50 = vxor.u32 %v49, 2147483648
  %v51 = vmul.f32 %v50, 1.442695
  %v52 = vpow.pop %v51
  %v53 = vadd.f32 %v52, 1.0
  %v54 = vrcp.pop %v53
  %v55 = vmul.f32 %v53, %v54
  %v56 = vsub.f32 1.0, %v55
  %v57 = vmul.f32 %v54, %v56
  %v58 = vadd.f32 %v54, %v57
  %vm59 = vweird.f32 %v53
  %vm60 = vweird.f32 %v54
  %vm61 = vmor %vm59, %vm60
  %v62 = vsel %vm61, %v54, %v58
  %v63 = vand.u32 2147483647, %v53
  %vm64 = vcmp.eq.f32.partialorder %v63, 8.507059e+37
  %v65 = vand.u32 %v53, 2147483648
  %v66 = vor.u32 1.1754944e-38, %v65
  %v67 = vsel %vm64, %v66, %v62
  %v68 = vmul.f32 1.0, %v67
  %v69 = vtanh.pop %v49
  %71 = vrot.lane.b32.xlu0 %v23, 32
  %v72 = vpop.permute.xlu0 %71
  %v74 = vmul.f32 %v68, %v72
  %76 = vrot.lane.b32.xlu0 %v69, 64
  %v77 = vpop.permute.xlu0 %76
  %v79 = vmul.f32 %v68, %v77
  %81 = vrot.lane.b32.xlu0 %v79, 32
  %v82 = vpop.permute.xlu0 %81
  %v84 = vadd.f32 %v74, %v82
  %v85 = vtanh.pop %v84
  %87 = vrot.lane.b32.xlu0 %v85, 64
  %v88 = vpop.permute.xlu0 %87
  %v90 = vmul.f32 %v68, %v88
  %92 = vrot.lane.b32.xlu0 %v90, 32
  %v93 = vpop.permute.xlu0 %92
  %95 = vst.msk [vmem:[%s2] sm:$0xff] %vm25, %v93
  %s96 = scalar_lea.vmem %s0, 8
  %v97 = vld [vmem:[%s96] sm:$0xff]
  %v98 = vsel %vm25, %v93, 0
  %100 = vmatpush.msra.mxu0 0.0
  %101 = vmatpush.msra.mxu0 0.0
  %102 = vmatpush.msra.mxu0 0.0
  %103 = vmatpush.msra.mxu0 0.0
  %104 = vmatpush.msra.mxu0 0.0
  %105 = vmatpush.msra.mxu0 0.0
  %106 = vmatpush.msra.mxu0 0.0
  %107 = vmatpush.msra.mxu0 0.0
  %108 = vmatpush.msra.mxu0 0.0
  %109 = vmatpush.msra.mxu0 0.0
  %110 = vmatpush.msra.mxu0 0.0
  %111 = vmatpush.msra.mxu0 0.0
  %112 = vmatpush.msra.mxu0 %v21
  %113 = vmatpush.msra.mxu0 %v20
  %114 = vmatpush.msra.mxu0 %v19
  %115 = vmatpush.msra.mxu0 %v18
  %116 = vmatmul.f32.gmra.mxu0 %v98
  %v117 = vpop.f32.mrf.mxu0
  %v118 = vadd.f32 0.0, %v117
  %119 = vdwg.mxu0
  %v120 = vadd.f32 %v97, %v118
  %v121 = vxor.u32 %v120, 2147483648
  %v122 = vmul.f32 %v121, 1.442695
  %v123 = vpow.pop %v122
  %v124 = vadd.f32 %v123, 1.0
  %v125 = vrcp.pop %v124
  %v126 = vmul.f32 %v124, %v125
  %v127 = vsub.f32 1.0, %v126
  %v128 = vmul.f32 %v125, %v127
  %v129 = vadd.f32 %v125, %v128
  %vm130 = vweird.f32 %v124
  %vm131 = vweird.f32 %v125
  %vm132 = vmor %vm130, %vm131
  %v133 = vsel %vm132, %v125, %v129
  %v134 = vand.u32 2147483647, %v124
  %vm135 = vcmp.eq.f32.partialorder %v134, 8.507059e+37
  %v136 = vand.u32 %v124, 2147483648
  %v137 = vor.u32 1.1754944e-38, %v136
  %v138 = vsel %vm135, %v137, %v133
  %v139 = vmul.f32 1.0, %v138
  %v140 = vtanh.pop %v120
  %v141 = vmul.f32 %v139, %v84
  %143 = vrot.lane.b32.xlu0 %v140, 64
  %v144 = vpop.permute.xlu0 %143
  %v146 = vmul.f32 %v139, %v144
  %148 = vrot.lane.b32.xlu0 %v146, 32
  %v149 = vpop.permute.xlu0 %148
  %v151 = vadd.f32 %v141, %v149
  %v152 = vtanh.pop %v151
  %154 = vrot.lane.b32.xlu0 %v152, 64
  %v155 = vpop.permute.xlu0 %154
  %v157 = vmul.f32 %v139, %v155
  %159 = vrot.lane.b32.xlu0 %v157, 32
  %v160 = vpop.permute.xlu0 %159
  %s162 = scalar_lea.vmem %s2, 8
  %163 = vst.msk [vmem:[%s162] sm:$0xff] %vm25, %v160
  %s164 = scalar_lea.vmem %s0, 16
  %v165 = vld [vmem:[%s164] sm:$0xff]
  %v166 = vsel %vm25, %v160, 0
  %168 = vmatpush.msra.mxu0 0.0
  %169 = vmatpush.msra.mxu0 0.0
  %170 = vmatpush.msra.mxu0 0.0
  %171 = vmatpush.msra.mxu0 0.0
  %172 = vmatpush.msra.mxu0 0.0
  %173 = vmatpush.msra.mxu0 0.0
  %174 = vmatpush.msra.mxu0 0.0
  %175 = vmatpush.msra.mxu0 0.0
  %176 = vmatpush.msra.mxu0 0.0
  %177 = vmatpush.msra.mxu0 0.0
  %178 = vmatpush.msra.mxu0 0.0
  %179 = vmatpush.msra.mxu0 0.0
  %180 = vmatpush.msra.mxu0 %v21
  %181 = vmatpush.msra.mxu0 %v20
  %182 = vmatpush.msra.mxu0 %v19
  %183 = vmatpush.msra.mxu0 %v18
  %184 = vmatmul.f32.gmra.mxu0 %v166
  %v185 = vpop.f32.mrf.mxu0
  %v186 = vadd.f32 0.0, %v185
  %187 = vdwg.mxu0
  %v188 = vadd.f32 %v165, %v186
  %v189 = vxor.u32 %v188, 2147483648
  %v190 = vmul.f32 %v189, 1.442695
  %v191 = vpow.pop %v190
  %v192 = vadd.f32 %v191, 1.0
  %v193 = vrcp.pop %v192
  %v194 = vmul.f32 %v192, %v193
  %v195 = vsub.f32 1.0, %v194
  %v196 = vmul.f32 %v193, %v195
  %v197 = vadd.f32 %v193, %v196
  %vm198 = vweird.f32 %v192
  %vm199 = vweird.f32 %v193
  %vm200 = vmor %vm198, %vm199
  %v201 = vsel %vm200, %v193, %v197
  %v202 = vand.u32 2147483647, %v192
  %vm203 = vcmp.eq.f32.partialorder %v202, 8.507059e+37
  %v204 = vand.u32 %v192, 2147483648
  %v205 = vor.u32 1.1754944e-38, %v204
  %v206 = vsel %vm203, %v205, %v201
  %v207 = vmul.f32 1.0, %v206
  %v208 = vtanh.pop %v188
  %v209 = vmul.f32 %v207, %v151
  %211 = vrot.lane.b32.xlu0 %v208, 64
  %v212 = vpop.permute.xlu0 %211
  %v214 = vmul.f32 %v207, %v212
  %216 = vrot.lane.b32.xlu0 %v214, 32
  %v217 = vpop.permute.xlu0 %216
  %v219 = vadd.f32 %v209, %v217
  %v220 = vtanh.pop %v219
  %222 = vrot.lane.b32.xlu0 %v220, 64
  %v223 = vpop.permute.xlu0 %222
  %v225 = vmul.f32 %v207, %v223
  %227 = vrot.lane.b32.xlu0 %v225, 32
  %v228 = vpop.permute.xlu0 %227
  %s230 = scalar_lea.vmem %s2, 16
  %231 = vst.msk [vmem:[%s230] sm:$0xff] %vm25, %v228
  %s232 = scalar_lea.vmem %s0, 24
  %v233 = vld [vmem:[%s232] sm:$0xff]
  %v234 = vsel %vm25, %v228, 0
  %236 = vmatpush.msra.mxu0 0.0
  %237 = vmatpush.msra.mxu0 0.0
  %238 = vmatpush.msra.mxu0 0.0
  %239 = vmatpush.msra.mxu0 0.0
  %240 = vmatpush.msra.mxu0 0.0
  %241 = vmatpush.msra.mxu0 0.0
  %242 = vmatpush.msra.mxu0 0.0
  %243 = vmatpush.msra.mxu0 0.0
  %244 = vmatpush.msra.mxu0 0.0
  %245 = vmatpush.msra.mxu0 0.0
  %246 = vmatpush.msra.mxu0 0.0
  %247 = vmatpush.msra.mxu0 0.0
  %248 = vmatpush.msra.mxu0 %v21
  %249 = vmatpush.msra.mxu0 %v20
  %250 = vmatpush.msra.mxu0 %v19
  %251 = vmatpush.msra.mxu0 %v18
  %252 = vmatmul.f32.gmra.mxu0 %v234
  %v253 = vpop.f32.mrf.mxu0
  %v254 = vadd.f32 0.0, %v253
  %255 = vdwg.mxu0
  %v256 = vadd.f32 %v233, %v254
  %v257 = vxor.u32 %v256, 2147483648
  %v258 = vmul.f32 %v257, 1.442695
  %v259 = vpow.pop %v258
  %v260 = vadd.f32 %v259, 1.0
  %v261 = vrcp.pop %v260
  %v262 = vmul.f32 %v260, %v261
  %v263 = vsub.f32 1.0, %v262
  %v264 = vmul.f32 %v261, %v263
  %v265 = vadd.f32 %v261, %v264
  %vm266 = vweird.f32 %v260
  %vm267 = vweird.f32 %v261
  %vm268 = vmor %vm266, %vm267
  %v269 = vsel %vm268, %v261, %v265
  %v270 = vand.u32 2147483647, %v260
  %vm271 = vcmp.eq.f32.partialorder %v270, 8.507059e+37
  %v272 = vand.u32 %v260, 2147483648
  %v273 = vor.u32 1.1754944e-38, %v272
  %v274 = vsel %vm271, %v273, %v269
  %v275 = vmul.f32 1.0, %v274
  %v276 = vtanh.pop %v256
  %v277 = vmul.f32 %v275, %v219
  %279 = vrot.lane.b32.xlu0 %v276, 64
  %v280 = vpop.permute.xlu0 %279
  %v282 = vmul.f32 %v275, %v280
  %284 = vrot.lane.b32.xlu0 %v282, 32
  %v285 = vpop.permute.xlu0 %284
  %v287 = vadd.f32 %v277, %v285
  %v288 = vtanh.pop %v287
  %290 = vrot.lane.b32.xlu0 %v288, 64
  %v291 = vpop.permute.xlu0 %290
  %v293 = vmul.f32 %v275, %v291
  %295 = vrot.lane.b32.xlu0 %v293, 32
  %v296 = vpop.permute.xlu0 %295
  %s298 = scalar_lea.vmem %s2, 24
  %299 = vst.msk [vmem:[%s298] sm:$0xff] %vm25, %v296
  %s300 = scalar_lea.vmem %s0, 32
  %v301 = vld [vmem:[%s300] sm:$0xff]
  %v302 = vsel %vm25, %v296, 0
  %304 = vmatpush.msra.mxu0 0.0
  %305 = vmatpush.msra.mxu0 0.0
  %306 = vmatpush.msra.mxu0 0.0
  %307 = vmatpush.msra.mxu0 0.0
  %308 = vmatpush.msra.mxu0 0.0
  %309 = vmatpush.msra.mxu0 0.0
  %310 = vmatpush.msra.mxu0 0.0
  %311 = vmatpush.msra.mxu0 0.0
  %312 = vmatpush.msra.mxu0 0.0
  %313 = vmatpush.msra.mxu0 0.0
  %314 = vmatpush.msra.mxu0 0.0
  %315 = vmatpush.msra.mxu0 0.0
  %316 = vmatpush.msra.mxu0 %v21
  %317 = vmatpush.msra.mxu0 %v20
  %318 = vmatpush.msra.mxu0 %v19
  %319 = vmatpush.msra.mxu0 %v18
  %320 = vmatmul.f32.gmra.mxu0 %v302
  %v321 = vpop.f32.mrf.mxu0
  %v322 = vadd.f32 0.0, %v321
  %323 = vdwg.mxu0
  %v324 = vadd.f32 %v301, %v322
  %v325 = vxor.u32 %v324, 2147483648
  %v326 = vmul.f32 %v325, 1.442695
  %v327 = vpow.pop %v326
  %v328 = vadd.f32 %v327, 1.0
  %v329 = vrcp.pop %v328
  %v330 = vmul.f32 %v328, %v329
  %v331 = vsub.f32 1.0, %v330
  %v332 = vmul.f32 %v329, %v331
  %v333 = vadd.f32 %v329, %v332
  %vm334 = vweird.f32 %v328
  %vm335 = vweird.f32 %v329
  %vm336 = vmor %vm334, %vm335
  %v337 = vsel %vm336, %v329, %v333
  %v338 = vand.u32 2147483647, %v328
  %vm339 = vcmp.eq.f32.partialorder %v338, 8.507059e+37
  %v340 = vand.u32 %v328, 2147483648
  %v341 = vor.u32 1.1754944e-38, %v340
  %v342 = vsel %vm339, %v341, %v337
  %v343 = vmul.f32 1.0, %v342
  %v344 = vtanh.pop %v324
  %v345 = vmul.f32 %v343, %v287
  %347 = vrot.lane.b32.xlu0 %v344, 64
  %v348 = vpop.permute.xlu0 %347
  %v350 = vmul.f32 %v343, %v348
  %352 = vrot.lane.b32.xlu0 %v350, 32
  %v353 = vpop.permute.xlu0 %352
  %v355 = vadd.f32 %v345, %v353
  %v356 = vtanh.pop %v355
  %358 = vrot.lane.b32.xlu0 %v356, 64
  %v359 = vpop.permute.xlu0 %358
  %v361 = vmul.f32 %v343, %v359
  %363 = vrot.lane.b32.xlu0 %v361, 32
  %v364 = vpop.permute.xlu0 %363
  %s366 = scalar_lea.vmem %s2, 32
  %367 = vst.msk [vmem:[%s366] sm:$0xff] %vm25, %v364
  %s368 = scalar_lea.vmem %s0, 40
  %v369 = vld [vmem:[%s368] sm:$0xff]
  %v370 = vsel %vm25, %v364, 0
  %372 = vmatpush.msra.mxu0 0.0
  %373 = vmatpush.msra.mxu0 0.0
  %374 = vmatpush.msra.mxu0 0.0
  %375 = vmatpush.msra.mxu0 0.0
  %376 = vmatpush.msra.mxu0 0.0
  %377 = vmatpush.msra.mxu0 0.0
  %378 = vmatpush.msra.mxu0 0.0
  %379 = vmatpush.msra.mxu0 0.0
  %380 = vmatpush.msra.mxu0 0.0
  %381 = vmatpush.msra.mxu0 0.0
  %382 = vmatpush.msra.mxu0 0.0
  %383 = vmatpush.msra.mxu0 0.0
  %384 = vmatpush.msra.mxu0 %v21
  %385 = vmatpush.msra.mxu0 %v20
  %386 = vmatpush.msra.mxu0 %v19
  %387 = vmatpush.msra.mxu0 %v18
  %388 = vmatmul.f32.gmra.mxu0 %v370
  %v389 = vpop.f32.mrf.mxu0
  %v390 = vadd.f32 0.0, %v389
  %391 = vdwg.mxu0
  %v392 = vadd.f32 %v369, %v390
  %v393 = vxor.u32 %v392, 2147483648
  %v394 = vmul.f32 %v393, 1.442695
  %v395 = vpow.pop %v394
  %v396 = vadd.f32 %v395, 1.0
  %v397 = vrcp.pop %v396
  %v398 = vmul.f32 %v396, %v397
  %v399 = vsub.f32 1.0, %v398
  %v400 = vmul.f32 %v397, %v399
  %v401 = vadd.f32 %v397, %v400
  %vm402 = vweird.f32 %v396
  %vm403 = vweird.f32 %v397
  %vm404 = vmor %vm402, %vm403
  %v405 = vsel %vm404, %v397, %v401
  %v406 = vand.u32 2147483647, %v396
  %vm407 = vcmp.eq.f32.partialorder %v406, 8.507059e+37
  %v408 = vand.u32 %v396, 2147483648
  %v409 = vor.u32 1.1754944e-38, %v408
  %v410 = vsel %vm407, %v409, %v405
  %v411 = vmul.f32 1.0, %v410
  %v412 = vtanh.pop %v392
  %v413 = vmul.f32 %v411, %v355
  %415 = vrot.lane.b32.xlu0 %v412, 64
  %v416 = vpop.permute.xlu0 %415
  %v418 = vmul.f32 %v411, %v416
  %420 = vrot.lane.b32.xlu0 %v418, 32
  %v421 = vpop.permute.xlu0 %420
  %v423 = vadd.f32 %v413, %v421
  %v424 = vtanh.pop %v423
  %426 = vrot.lane.b32.xlu0 %v424, 64
  %v427 = vpop.permute.xlu0 %426
  %v429 = vmul.f32 %v411, %v427
  %431 = vrot.lane.b32.xlu0 %v429, 32
  %v432 = vpop.permute.xlu0 %431
  %s434 = scalar_lea.vmem %s2, 40
  %435 = vst.msk [vmem:[%s434] sm:$0xff] %vm25, %v432
  %s436 = scalar_lea.vmem %s0, 48
  %v437 = vld [vmem:[%s436] sm:$0xff]
  %v438 = vsel %vm25, %v432, 0
  %440 = vmatpush.msra.mxu0 0.0
  %441 = vmatpush.msra.mxu0 0.0
  %442 = vmatpush.msra.mxu0 0.0
  %443 = vmatpush.msra.mxu0 0.0
  %444 = vmatpush.msra.mxu0 0.0
  %445 = vmatpush.msra.mxu0 0.0
  %446 = vmatpush.msra.mxu0 0.0
  %447 = vmatpush.msra.mxu0 0.0
  %448 = vmatpush.msra.mxu0 0.0
  %449 = vmatpush.msra.mxu0 0.0
  %450 = vmatpush.msra.mxu0 0.0
  %451 = vmatpush.msra.mxu0 0.0
  %452 = vmatpush.msra.mxu0 %v21
  %453 = vmatpush.msra.mxu0 %v20
  %454 = vmatpush.msra.mxu0 %v19
  %455 = vmatpush.msra.mxu0 %v18
  %456 = vmatmul.f32.gmra.mxu0 %v438
  %v457 = vpop.f32.mrf.mxu0
  %v458 = vadd.f32 0.0, %v457
  %459 = vdwg.mxu0
  %v460 = vadd.f32 %v437, %v458
  %v461 = vxor.u32 %v460, 2147483648
  %v462 = vmul.f32 %v461, 1.442695
  %v463 = vpow.pop %v462
  %v464 = vadd.f32 %v463, 1.0
  %v465 = vrcp.pop %v464
  %v466 = vmul.f32 %v464, %v465
  %v467 = vsub.f32 1.0, %v466
  %v468 = vmul.f32 %v465, %v467
  %v469 = vadd.f32 %v465, %v468
  %vm470 = vweird.f32 %v464
  %vm471 = vweird.f32 %v465
  %vm472 = vmor %vm470, %vm471
  %v473 = vsel %vm472, %v465, %v469
  %v474 = vand.u32 2147483647, %v464
  %vm475 = vcmp.eq.f32.partialorder %v474, 8.507059e+37
  %v476 = vand.u32 %v464, 2147483648
  %v477 = vor.u32 1.1754944e-38, %v476
  %v478 = vsel %vm475, %v477, %v473
  %v479 = vmul.f32 1.0, %v478
  %v480 = vtanh.pop %v460
  %v481 = vmul.f32 %v479, %v423
  %483 = vrot.lane.b32.xlu0 %v480, 64
  %v484 = vpop.permute.xlu0 %483
  %v486 = vmul.f32 %v479, %v484
  %488 = vrot.lane.b32.xlu0 %v486, 32
  %v489 = vpop.permute.xlu0 %488
  %v491 = vadd.f32 %v481, %v489
  %v492 = vtanh.pop %v491
  %494 = vrot.lane.b32.xlu0 %v492, 64
  %v495 = vpop.permute.xlu0 %494
  %v497 = vmul.f32 %v479, %v495
  %499 = vrot.lane.b32.xlu0 %v497, 32
  %v500 = vpop.permute.xlu0 %499
  %s502 = scalar_lea.vmem %s2, 48
  %503 = vst.msk [vmem:[%s502] sm:$0xff] %vm25, %v500
  %s504 = scalar_lea.vmem %s0, 56
  %v505 = vld [vmem:[%s504] sm:$0xff]
  %v506 = vsel %vm25, %v500, 0
  %508 = vmatpush.msra.mxu0 0.0
  %509 = vmatpush.msra.mxu0 0.0
  %510 = vmatpush.msra.mxu0 0.0
  %511 = vmatpush.msra.mxu0 0.0
  %512 = vmatpush.msra.mxu0 0.0
  %513 = vmatpush.msra.mxu0 0.0
  %514 = vmatpush.msra.mxu0 0.0
  %515 = vmatpush.msra.mxu0 0.0
  %516 = vmatpush.msra.mxu0 0.0
  %517 = vmatpush.msra.mxu0 0.0
  %518 = vmatpush.msra.mxu0 0.0
  %519 = vmatpush.msra.mxu0 0.0
  %520 = vmatpush.msra.mxu0 %v21
  %521 = vmatpush.msra.mxu0 %v20
  %522 = vmatpush.msra.mxu0 %v19
  %523 = vmatpush.msra.mxu0 %v18
  %524 = vmatmul.f32.gmra.mxu0 %v506
  %v525 = vpop.f32.mrf.mxu0
  %v526 = vadd.f32 0.0, %v525
  %527 = vdwg.mxu0
  %v528 = vadd.f32 %v505, %v526
  %v529 = vxor.u32 %v528, 2147483648
  %v530 = vmul.f32 %v529, 1.442695
  %v531 = vpow.pop %v530
  %v532 = vadd.f32 %v531, 1.0
  %v533 = vrcp.pop %v532
  %v534 = vmul.f32 %v532, %v533
  %v535 = vsub.f32 1.0, %v534
  %v536 = vmul.f32 %v533, %v535
  %v537 = vadd.f32 %v533, %v536
  %vm538 = vweird.f32 %v532
  %vm539 = vweird.f32 %v533
  %vm540 = vmor %vm538, %vm539
  %v541 = vsel %vm540, %v533, %v537
  %v542 = vand.u32 2147483647, %v532
  %vm543 = vcmp.eq.f32.partialorder %v542, 8.507059e+37
  %v544 = vand.u32 %v532, 2147483648
  %v545 = vor.u32 1.1754944e-38, %v544
  %v546 = vsel %vm543, %v545, %v541
  %v547 = vmul.f32 1.0, %v546
  %v548 = vtanh.pop %v528
  %v549 = vmul.f32 %v547, %v491
  %551 = vrot.lane.b32.xlu0 %v548, 64
  %v552 = vpop.permute.xlu0 %551
  %v554 = vmul.f32 %v547, %v552
  %556 = vrot.lane.b32.xlu0 %v554, 32
  %v557 = vpop.permute.xlu0 %556
  %v559 = vadd.f32 %v549, %v557
  %v560 = vtanh.pop %v559
  %562 = vrot.lane.b32.xlu0 %v560, 64
  %v563 = vpop.permute.xlu0 %562
  %v565 = vmul.f32 %v547, %v563
  %567 = vrot.lane.b32.xlu0 %v565, 32
  %v568 = vpop.permute.xlu0 %567
  %s570 = scalar_lea.vmem %s2, 56
  %571 = vst.msk [vmem:[%s570] sm:$0xff] %vm25, %v568
  %572 = vst.msk [vmem:[#allocation2] sm:$0xff] %vm25, %v568
  %574 = vrot.lane.b32.xlu0 %v559, 96
  %v575 = vpop.permute.xlu0 %574
  %577 = vst.msk [vmem:[#allocation3] sm:$0xff] %vm25, %v575
  // Predicated region
  $region14: #{lstm_cls_reg_forward.1} parent=0 // pred_check
    _
  $region15: #{lstm_cls_reg_forward.1} parent=0 // pred_check_branch
    %579 = sbr.rel (0) target = $region17
  $region16: #{lstm_cls_reg_forward.1} parent=0 // pred_region
    _
  $region17: #{lstm_cls_reg_forward.1} parent=0 // pred_fallthru
    _
  // Predicated region
  $region18: #{lstm_cls_reg_forward.1} parent=0 // pred_check
    _
  $region19: #{lstm_cls_reg_forward.1} parent=0 // pred_check_branch
    %581 = sbr.rel (0) target = $region21
  $region20: #{lstm_cls_reg_forward.1} parent=0 // pred_region
    _
  $region21: #{lstm_cls_reg_forward.1} parent=0 // pred_fallthru
    _

</llo_original>
